<compile_context>
chip_gen: v5e
topology: v5e:2x2
jax: 0.10.0
libtpu: 0.0.40
codegen_flags: <defaults>
</compile_context>

<pallas_src>
import functools

import jax
import jax.numpy as jnp
from jax.experimental import pallas as pl
from jax.experimental.pallas import tpu as pltpu


# ---------------------------------------------------------------------------
# Kernel body
# ---------------------------------------------------------------------------
def _average_fusion_kernel(x_ref, o_ref, acc_ref, *, inv_n):
    """x_ref: (TB, TN, TD) block, o_ref: (TB, TD) block, acc_ref: f32 scratch."""
    k = pl.program_id(2)  # reduction (N) axis -- last grid dim, "arbitrary"

    @pl.when(k == 0)
    def _init():
        acc_ref[...] = jnp.zeros_like(acc_ref)

    # Reduce this chunk over the view axis; upcast only the chunk, not the
    # whole operand, so VMEM/vreg pressure stays bounded by the tile choice.
    acc_ref[...] += jnp.sum(x_ref[...].astype(jnp.float32), axis=1)

    @pl.when(k == pl.num_programs(2) - 1)
    def _finalize():
        o_ref[...] = (acc_ref[...] * inv_n).astype(o_ref.dtype)


# ---------------------------------------------------------------------------
# Tile selection
# ---------------------------------------------------------------------------
def _pick(dim, candidates):
    for c in candidates:
        if dim >= c and dim % c == 0:
            return c
    return dim  # fall back to the full dim (always legal for BlockSpec)


def _halvable(t, dim, quantum):
    h = t // 2
    return t % 2 == 0 and h >= quantum and h % quantum == 0 and dim % h == 0


def _choose_tiles(B, N, D, in_bytes, out_bytes, budget_bytes):
    # Lane-dense feature tiles (multiples of 128) when D permits; otherwise the
    # full D (required by the (8,128) rule and the only option for small D).
    TD = _pick(D, (512, 256, 128))
    TN = _pick(N, (32, 16, 8))
    TB = _pick(B, (512, 256, 128, 64, 32, 16, 8))

    def fits(tb, tn, td):
        step = (2 * tb * tn * td * in_bytes    # double-buffered input block
                + tb * tn * td * 4             # in-kernel f32 upcast of chunk
                + 2 * tb * td * out_bytes      # double-buffered output block
                + tb * td * 4)                 # f32 accumulator scratch
        return step <= budget_bytes

    while not fits(TB, TN, TD) and _halvable(TB, B, 8):
        TB //= 2
    while not fits(TB, TN, TD) and _halvable(TN, N, 8):
        TN //= 2
    while not fits(TB, TN, TD) and _halvable(TD, D, 128):
        TD //= 2
    return TB, TN, TD


# ---------------------------------------------------------------------------
# Wrapper
# ---------------------------------------------------------------------------
_VMEM_LIMIT_BYTES = 32 * 1024 * 1024   # explicit; safe on v5e/v6e/v7x
_TILE_BUDGET_BYTES = 12 * 1024 * 1024  # leaves headroom inside the 32 MiB limit
_MIN_PALLAS_BYTES = 1 << 20            # below this, launch overhead dominates


def average_fusion(x, *, force_pallas=False):
    """Pallas implementation of AverageFusion.forward: mean over dim=1.

    x: (B, N, D) -> (B, D), same dtype as x.
    """
    B, N, D = x.shape
    in_bytes = jnp.dtype(x.dtype).itemsize
    out_bytes = in_bytes

    # Tiny operands (the actual MST fusion shapes): let XLA fuse a plain mean.
    if not force_pallas and (B * N * D * in_bytes) < _MIN_PALLAS_BYTES:
        return jnp.mean(x, axis=1)

    TB, TN, TD = _choose_tiles(B, N, D, in_bytes, out_bytes, _TILE_BUDGET_BYTES)
    grid = (B // TB, D // TD, N // TN)  # reduction axis last

    kernel = functools.partial(_average_fusion_kernel, inv_n=float(1.0 / N))

    cost = pl.CostEstimate(
        flops=B * N * D,            # the adds of the reduction
        transcendentals=0,
        bytes_accessed=B * N * D * in_bytes + B * D * out_bytes,
    )

    return pl.pallas_call(
        kernel,
        out_shape=jax.ShapeDtypeStruct((B, D), x.dtype),
        grid_spec=pltpu.PrefetchScalarGridSpec(
            num_scalar_prefetch=0,
            grid=grid,
            in_specs=[
                # (batch tile i, view tile k, feature tile j)
                pl.BlockSpec((TB, TN, TD), lambda i, j, k: (i, k, j)),
            ],
            out_specs=pl.BlockSpec((TB, TD), lambda i, j, k: (i, j)),
            scratch_shapes=[pltpu.VMEM((TB, TD), jnp.float32)],
        ),
        compiler_params=pltpu.CompilerParams(
            dimension_semantics=("parallel", "parallel", "arbitrary"),
            vmem_limit_bytes=_VMEM_LIMIT_BYTES,
        ),
        cost_estimate=cost,
    )(x)


# ---------------------------------------------------------------------------
# Test
# ---------------------------------------------------------------------------
if __name__ == "__main__":
    key = jax.random.PRNGKey(0)

    # 1) Canonical small MST fusion shape: batch=2, num_views=8, hidden=32.
    #    Forced through the Pallas path to exercise the kernel (single-block grid).
    k1, k2 = jax.random.split(key)
    x_small = jax.random.normal(k1, (2, 8, 32), dtype=jnp.float32)
    out_small = jax.block_until_ready(average_fusion(x_small, force_pallas=True))
    ref_small = jnp.mean(x_small, axis=1)
    assert out_small.shape == ref_small.shape == (2, 32)
    assert jnp.allclose(out_small, ref_small, atol=1e-5, rtol=1e-5), \
        "mismatch vs reference mean (small)"

    # 2) A larger shape that exercises the tiled / pipelined path
    #    (TB=64, TN=16, TD=128, grid=(1, 3, 1), lane-dense output blocks).
    x_big = jax.random.normal(k2, (64, 16, 384), dtype=jnp.float32)
    out_big = jax.block_until_ready(average_fusion(x_big))
    ref_big = jnp.mean(x_big, axis=1)
    assert out_big.shape == ref_big.shape == (64, 384)
    assert jnp.allclose(out_big, ref_big, atol=1e-5, rtol=1e-5), \
        "mismatch vs reference mean (big)"

    print("KERNEL_OK")
</pallas_src>

<mosaic_0001>
module attributes {stable_mosaic.version = 11 : i64} {
  func.func @_average_fusion_kernel(%arg0: i32, %arg1: i32, %arg2: i32, %arg3: memref<2x8x32xf32, #tpu.memory_space<vmem>>, %arg4: memref<2x32xf32, #tpu.memory_space<vmem>>, %arg5: memref<2x32xf32, #tpu.memory_space<vmem>>) attributes {dimension_semantics = [#tpu.dimension_semantics<parallel>, #tpu.dimension_semantics<parallel>, #tpu.dimension_semantics<arbitrary>], iteration_bounds = array<i64: 1, 1, 1>, scalar_prefetch = 0 : i64, scratch_operands = 1 : i64, tpu.core_type = #tpu.core_type<tc>, window_params = [{transform_indices = @transform_0, window_bounds = array<i64: 2, 8, 32>}, {transform_indices = @transform_1, window_bounds = array<i64: 2, 32>}]} {
    %c0_i32 = arith.constant 0 : i32
    %0 = arith.cmpi eq, %arg2, %c0_i32 : i32
    %1 = arith.extui %0 : i1 to i32
    %c0_i32_0 = arith.constant 0 : i32
    %2 = arith.cmpi ne, %1, %c0_i32_0 : i32
    scf.if %2 {
      %cst_9 = arith.constant 0.000000e+00 : f32
      %11 = vector.broadcast %cst_9 : f32 to vector<2x32xf32>
      %c0_10 = arith.constant 0 : index
      %c0_11 = arith.constant 0 : index
      %12 = vector.load %arg5[%c0_10, %c0_11] : memref<2x32xf32, #tpu.memory_space<vmem>>, vector<2x32xf32>
      tpu.vector_store %arg5[%c0_10, %c0_11], %11 {strides = array<i32>} : memref<2x32xf32, #tpu.memory_space<vmem>>, vector<2x32xf32>,
    } else {
    }
    %c0 = arith.constant 0 : index
    %c0_1 = arith.constant 0 : index
    %3 = vector.load %arg5[%c0, %c0_1] : memref<2x32xf32, #tpu.memory_space<vmem>>, vector<2x32xf32>
    %c0_2 = arith.constant 0 : index
    %c0_3 = arith.constant 0 : index
    %c0_4 = arith.constant 0 : index
    %4 = vector.load %arg3[%c0_2, %c0_3, %c0_4] : memref<2x8x32xf32, #tpu.memory_space<vmem>>, vector<2x8x32xf32>
    %cst = arith.constant dense<0.000000e+00> : vector<2x32xf32>
    %5 = vector.multi_reduction <add>, %4, %cst [1] : vector<2x8x32xf32> to vector<2x32xf32>
    %6 = arith.addf %3, %5 : vector<2x32xf32>
    %c0_5 = arith.constant 0 : index
    %c0_6 = arith.constant 0 : index
    %7 = vector.load %arg5[%c0_5, %c0_6] : memref<2x32xf32, #tpu.memory_space<vmem>>, vector<2x32xf32>
    tpu.vector_store %arg5[%c0_5, %c0_6], %6 {strides = array<i32>} : memref<2x32xf32, #tpu.memory_space<vmem>>, vector<2x32xf32>,
    %c0_i32_7 = arith.constant 0 : i32
    %8 = arith.cmpi eq, %arg2, %c0_i32_7 : i32
    %9 = arith.extui %8 : i1 to i32
    %c0_i32_8 = arith.constant 0 : i32
    %10 = arith.cmpi ne, %9, %c0_i32_8 : i32
    scf.if %10 {
      %c0_9 = arith.constant 0 : index
      %c0_10 = arith.constant 0 : index
      %11 = vector.load %arg5[%c0_9, %c0_10] : memref<2x32xf32, #tpu.memory_space<vmem>>, vector<2x32xf32>
      %cst_11 = arith.constant 1.250000e-01 : f32
      %12 = vector.broadcast %cst_11 : f32 to vector<2x32xf32>
      %13 = arith.mulf %11, %12 : vector<2x32xf32>
      %c0_12 = arith.constant 0 : index
      %c0_13 = arith.constant 0 : index
      %14 = vector.load %arg4[%c0_12, %c0_13] : memref<2x32xf32, #tpu.memory_space<vmem>>, vector<2x32xf32>
      tpu.vector_store %arg4[%c0_12, %c0_13], %13 {strides = array<i32>} : memref<2x32xf32, #tpu.memory_space<vmem>>, vector<2x32xf32>,
    } else {
    }
    return
  }
  func.func @transform_0(%arg0: i32, %arg1: i32, %arg2: i32) -> (i32, i32, i32) {
    %c0_i32 = arith.constant 0 : i32
    return %arg0, %arg2, %arg1 : i32, i32, i32
  }
  func.func @transform_1(%arg0: i32, %arg1: i32, %arg2: i32) -> (i32, i32) {
    %c0_i32 = arith.constant 0 : i32
    return %arg0, %arg1 : i32, i32
  }
}

</mosaic_0001>

<llo_original>
// kernel: tpu_custom_call.1
$region0: #{tpu_custom_call.1}
  #allocation0 [shape = 'u32[]', space=smem, size = 0x4, offset = 0x4, fixed_abs, tag = 'smem constant byte address 0x4 - core index']
  #allocation1 [shape = 'u32[72,128]{1,0:T(1,128)}', space=vmem, size = 0x9000, scoped, tag = 'internal scratch']
  #allocation2 [shape = 'f32[2,32]{1,0:T(2,128)}', space=vmem, size = 0x400, scoped, tag = 'scratch operand']
  %s0 = inlined_call_operand.hbm [shape: f32[2,8,32], index: 0, kind: input, shape index: {}]
  %s1 = inlined_call_operand.hbm [shape: f32[2,32], index: 1, kind: output, shape index: {}]
  %s2 = sld [smem:[#allocation0]]
  $region26: #{tpu_custom_call.1} parent=0
    _
  %s4 = ssub.s32 1, %s2
  %s5 = scalar_select 0, %s4, %s2
  $region1: #{tpu_custom_call.1} parent=0
    #allocation3 [shape = 'u8[8192]{0}', space=vmem, size = 0x2000, scoped, tag = 'input window, operand 0, single buffered']
    #allocation4 [shape = 's32[1]{0}', space=sflag, size = 0x4, scoped, tag = 'scoped memory for tpu_custom_call.1']
    #allocation5 [shape = 's32[1]{0}', space=sflag, size = 0x4, scoped, tag = 'scoped memory for tpu_custom_call.1']
    #allocation6 [shape = 'u8[1024]{0}', space=vmem, size = 0x400, scoped, tag = 'output window, operand 0, single buffered']
    %6 = vsyncpa [#allocation4], 0
    %7 = vsyncpa [#allocation5], 0
    // Predicated region
    $region2: #{tpu_custom_call.1} parent=1 // pred_check
      _
    $region3: #{tpu_custom_call.1} parent=1 // pred_check_branch
      %9 = sbr.rel (0) target = $region5
    $region4: #{tpu_custom_call.1} parent=1 // pred_region
      %11 = vsyncadd [#allocation4], 0
      %s12 = sshll.u32 %s0, 4
      %s13 = int_to_ptr.hbm [resolvable:$true] %s12
      %s14 = sshll.u32 [#allocation3], 4
      %s15 = int_to_ptr.vmem [resolvable:$true] %s14
      %20 = dma.hbm_to_vmem [thread:$0]  %s13, 256, %s15, [#allocation4], 128, 128, 8
    $region5: #{tpu_custom_call.1} parent=1 // pred_fallthru
      _
    // Predicated region
    $region6: #{tpu_custom_call.1} parent=1 // pred_check
      _
    $region7: #{tpu_custom_call.1} parent=1 // pred_check_branch
      %22 = sbr.rel (0) target = $region9
    $region8: #{tpu_custom_call.1} parent=1 // pred_region
      %24 = dma.done [#allocation4], 256
    $region9: #{tpu_custom_call.1} parent=1 // pred_fallthru
      _
    %p25 = scmp.eq.s32.totalorder 0, 0
    // Predicated region
    $region10: #{tpu_custom_call.1} parent=1 // pred_check
      %p26 = pneg %p25
    $region11: #{tpu_custom_call.1} parent=1 // pred_check_branch
      %28 = sbr.rel (%p26) target = $region13
    $region12: #{tpu_custom_call.1} parent=1 // pred_region
      %vm29 = vcmask 254976
      %30 = vst.msk [vmem:[#allocation2] sm:$0x3] %vm29, 0.0
    $region13: #{tpu_custom_call.1} parent=1 // pred_fallthru
      _
    %v31 = vld [vmem:[#allocation2] sm:$0x3]
    %v32 = vld [vmem:[#allocation3] sm:$0xff]
    %v33 = vld [vmem:[#allocation3 + $0x8] sm:$0xff]
    %vm34 = vcmask 261120
    %v35 = vsel %vm34, %v32, 0.0
    %v36 = vrot.slane %v35, 4
    %v37 = vadd.f32 %v35, %v36
    %v38 = vrot.slane %v37, 2
    %v39 = vadd.f32 %v37, %v38
    %v40 = vrot.slane %v39, 1
    %v41 = vadd.f32 %v39, %v40
    %v42 = vsel %vm34, %v33, 0.0
    %v43 = vrot.slane %v42, 4
    %v44 = vadd.f32 %v42, %v43
    %v45 = vrot.slane %v44, 2
    %v46 = vadd.f32 %v44, %v45
    %v47 = vrot.slane %v46, 1
    %v48 = vadd.f32 %v46, %v47
    %vm51 = vcmask 1041409
    %v52 = vsel %vm51, %v48, %v41
    %v54 = vadd.f32 %v31, %v52
    %vm55 = vcmask 254976
    %56 = vst.msk [vmem:[#allocation2] sm:$0x3] %vm55, %v54
    // Predicated region
    $region14: #{tpu_custom_call.1} parent=1 // pred_check
      %p57 = pneg %p25
    $region15: #{tpu_custom_call.1} parent=1 // pred_check_branch
      %59 = sbr.rel (%p57) target = $region17
    $region16: #{tpu_custom_call.1} parent=1 // pred_region
      %v60 = vld [vmem:[#allocation2] sm:$0x3]
      %v61 = vmul.f32 %v60, 0.125
      %62 = vst.msk [vmem:[#allocation6] sm:$0x3] %vm55, %v61
    $region17: #{tpu_custom_call.1} parent=1 // pred_fallthru
      _
    // Predicated region
    $region18: #{tpu_custom_call.1} parent=1 // pred_check
      _
    $region19: #{tpu_custom_call.1} parent=1 // pred_check_branch
      %64 = sbr.rel (0) target = $region21
    $region20: #{tpu_custom_call.1} parent=1 // pred_region
      %66 = vsyncadd [#allocation5], 0
      %s68 = sshll.u32 [#allocation6], 4
      %s69 = int_to_ptr.vmem [resolvable:$true] %s68
      %s70 = sshll.u32 %s1, 4
      %s71 = int_to_ptr.hbm [resolvable:$true] %s70
      %73 = dma.vmem_to_hbm [thread:$0]  %s69, 32, %s71, [#allocation5]
    $region21: #{tpu_custom_call.1} parent=1 // pred_fallthru
      _
    // Predicated region
    $region22: #{tpu_custom_call.1} parent=1 // pred_check
      _
    $region23: #{tpu_custom_call.1} parent=1 // pred_check_branch
      %75 = sbr.rel (0) target = $region25
    $region24: #{tpu_custom_call.1} parent=1 // pred_region
      %77 = dma.done [#allocation5], 32
    $region25: #{tpu_custom_call.1} parent=1 // pred_fallthru
      _
    %78 = vsyncpa [#allocation4], 1
    %79 = vsyncpa [#allocation5], 1

</llo_original>
